<compile_context>
chip_gen: v7x
topology: tpu7x:2x2x1
jax: 0.10.0
libtpu: 0.0.40
codegen_flags: <defaults>
</compile_context>

<pallas_src>
import functools

import jax
import jax.numpy as jnp
from jax.experimental import pallas as pl
from jax.experimental.pallas import tpu as pltpu

_LANE = 128


def _channel_matmul(w, x, use_vpu):
    """w: (O, I), x: (I, T)  ->  (O, T), accumulated in f32."""
    if use_vpu:
        # Degenerate channel counts (<= 8): the MXU would be >96% idle, so
        # unroll the contraction as I outer-product FMAs on full-lane vregs.
        # Explicit f32 casts keep this path portable (v5e VALU has no bf16).
        out = w[:, 0:1].astype(jnp.float32) * x[0:1, :].astype(jnp.float32)
        for c in range(1, w.shape[1]):
            out = out + w[:, c:c + 1].astype(jnp.float32) * x[c:c + 1, :].astype(jnp.float32)
        return out
    # Realistic channel widths: MXU matmul with f32 accumulation.
    return jnp.dot(w, x, preferred_element_type=jnp.float32)


def mlp_kernel(x_ref, w1_ref, b1_ref, w2_ref, b2_ref, o_ref, *, use_vpu):
    # x_ref : (Cin, T)      channels on sublanes, spatial on lanes (lane dense)
    # w1_ref: (Chid, Cin)   b1_ref: (Chid, 1)
    # w2_ref: (Cout, Chid)  b2_ref: (Cout, 1)
    # o_ref : (Cout, T)
    x = x_ref[...]
    h = _channel_matmul(w1_ref[...], x, use_vpu) + b1_ref[...].astype(jnp.float32)
    h = jnp.clip(h, 0.0, 6.0)                                  # ReLU6
    if not use_vpu:
        # Keep the 2nd matmul in the native weight dtype: with bf16 params this
        # is a single-pass bf16xbf16 MXU op instead of a multi-pass f32 one.
        h = h.astype(w2_ref.dtype)
    o = _channel_matmul(w2_ref[...], h, use_vpu) + b2_ref[...].astype(jnp.float32)
    # Dropout(p=0.0) (module default) is the identity.
    o_ref[...] = o.astype(o_ref.dtype)


def _vmem_capacity_bytes():
    try:
        info = pltpu.get_tpu_info()
        cap = getattr(info, "vmem_capacity_bytes", None)
        if cap:
            return int(cap)
    except Exception:
        pass
    return 64 * 1024 * 1024  # conservative default (v7x per-TC VMEM)


def _weight_spec(shape):
    # Grid-invariant weights/biases: single-buffer them (double buffering a
    # block whose index map never changes only wastes VMEM; this matters on
    # v7x's 64 MiB once channel counts are realistic).
    try:
        return pl.BlockSpec(shape, lambda n, s: (0, 0), pipeline_mode=pl.Buffered(1))
    except TypeError:  # older jax without pipeline_mode: default double buffer
        return pl.BlockSpec(shape, lambda n, s: (0, 0))


def mlp_pallas(x_nchw, w1, b1, w2, b2, *, tile_spatial=None):
    """x_nchw: (N, C, H, W); w1: (Chid, Cin); b1: (Chid, 1); w2: (Cout, Chid); b2: (Cout, 1).

    Weight layout matches PyTorch Conv2d weight (O, I, 1, 1) squeezed to (O, I).
    """
    N, C, H, W = x_nchw.shape
    Chid, Cin = w1.shape
    Cout, Chid2 = w2.shape
    assert C == Cin and Chid2 == Chid

    S = H * W
    # Native-layout slab (N, C, S): pure reshape, zero data movement.
    x3d = x_nchw.reshape(N, C, S)

    x_item = jnp.dtype(x_nchw.dtype).itemsize
    w_item = jnp.dtype(w1.dtype).itemsize
    weight_bytes = (Chid * Cin + Chid + Cout * Chid + Cout) * w_item

    # Per-generation VMEM budget (v5e/v6e: 128 MiB, v7x: 64 MiB); keep ~25%
    # headroom for compiler-internal scratch.
    vmem_cap = min(_vmem_capacity_bytes(), 128 * 1024 * 1024)
    budget = (vmem_cap * 3) // 4

    # VMEM bytes per spatial element: x & out double-buffered tiles plus the
    # f32 h / accumulator intermediates materialized inside the kernel body.
    per_elem = 2 * Cin * x_item + 2 * Cout * x_item + (Chid + Cout) * 4
    max_ts = max((budget - weight_bytes) // per_elem, _LANE)
    # TODO(synk): for very wide channels where the weights alone approach the
    # budget, add a channel-contraction grid axis + VMEM f32 accumulator
    # (init/finalize via pl.when) instead of shrinking the spatial tile.

    if tile_spatial is None:
        # Memory-bound kernel: target >= ~2 MiB of x bytes per grid step so the
        # ~0.35us fixed per-step overhead is amortized (the dominant cost when
        # C is tiny), capped by the VMEM-derived bound.
        desired = max(512, (2 * 1024 * 1024) // max(Cin * x_item, 1))
        desired = min(desired, 32768)
    else:
        desired = max(int(tile_spatial), _LANE)
    ts = min(desired, int(max_ts))
    ts = max((ts // _LANE) * _LANE, _LANE)  # lane-dense multiple of 128

    if ts >= S:
        ts = S                 # block == full dim is always a legal block shape
        grid_s = 1
    else:
        grid_s = pl.cdiv(S, ts)  # ragged last block is masked by Pallas
    grid = (N, grid_s)

    use_vpu = max(Cin, Chid, Cout) <= 8
    kernel = functools.partial(mlp_kernel, use_vpu=use_vpu)

    flops = 2 * N * S * Chid * (Cin + Cout)
    bytes_accessed = N * S * (Cin + Cout) * x_item + weight_bytes
    vmem_limit = int(min(budget + 8 * 1024 * 1024, vmem_cap - 4 * 1024 * 1024))

    out3d = pl.pallas_call(
        kernel,
        out_shape=jax.ShapeDtypeStruct((N, Cout, S), x_nchw.dtype),
        grid=grid,
        in_specs=[
            # x tile: batch squeezed, channels full, spatial tiled on lanes.
            pl.BlockSpec((None, Cin, ts), lambda n, s: (n, 0, s)),
            # Grid-invariant weights / biases, single-buffered.
            _weight_spec((Chid, Cin)),
            _weight_spec((Chid, 1)),
            _weight_spec((Cout, Chid)),
            _weight_spec((Cout, 1)),
        ],
        # Lane-dense output block: last dim multiple of 128 -> unmasked vst.
        out_specs=pl.BlockSpec((None, Cout, ts), lambda n, s: (n, 0, s)),
        compiler_params=pltpu.CompilerParams(
            # Both grid axes are independent -> megacore/2-TC sharding.
            # TODO(synk): on v7x, if a profile shows one TensorCore idle, mark
            # the batch axis pltpu.CORE_PARALLEL explicitly.
            dimension_semantics=("parallel", "parallel"),
            vmem_limit_bytes=vmem_limit,
        ),
        cost_estimate=pl.CostEstimate(
            flops=flops, transcendentals=0, bytes_accessed=bytes_accessed),
    )(x3d, w1, b1, w2, b2)

    return out3d.reshape(N, Cout, H, W)   # free reshape, output stays NCHW


def mlp_reference(x_nchw, w1, b1, w2, b2):
    # Plain-JAX reference of the PyTorch forward (1x1 convs == channel matmuls).
    h = jnp.einsum("oc,nchw->nohw", w1, x_nchw) + b1.reshape(1, -1, 1, 1)
    h = jnp.clip(h, 0.0, 6.0)
    return jnp.einsum("oc,nchw->nohw", w2, h) + b2.reshape(1, -1, 1, 1)


if __name__ == "__main__":
    key = jax.random.PRNGKey(0)
    k_x, k_w1, k_b1, k_w2, k_b2 = jax.random.split(key, 5)

    # Module config: in_dim=4  =>  hidden_dim = out_dim = in_dim = 4
    N, C, H, W = 2, 4, 16, 16
    in_dim = C
    hidden_dim = in_dim
    out_dim = in_dim

    x = jax.random.normal(k_x, (N, C, H, W), dtype=jnp.float32)

    # Deterministic synthetic params; conv weights (O, I, 1, 1) stored as (O, I).
    w1 = 0.1 * jax.random.normal(k_w1, (hidden_dim, in_dim), dtype=jnp.float32)
    b1 = 0.1 * jax.random.normal(k_b1, (hidden_dim, 1), dtype=jnp.float32)
    w2 = 0.1 * jax.random.normal(k_w2, (out_dim, hidden_dim), dtype=jnp.float32)
    b2 = 0.1 * jax.random.normal(k_b2, (out_dim, 1), dtype=jnp.float32)

    out = mlp_pallas(x, w1, b1, w2, b2)
    out = jax.block_until_ready(out)

    ref = mlp_reference(x, w1, b1, w2, b2)
    assert out.shape == (N, out_dim, H, W)
    assert jnp.allclose(out, ref, atol=1e-5, rtol=1e-5)

    print("KERNEL_OK")
</pallas_src>

<mosaic_0001>
module attributes {stable_mosaic.version = 11 : i64} {
  func.func @mlp_kernel(%arg0: i32, %arg1: i32, %arg2: memref<1x4x256xf32, #tpu.memory_space<vmem>>, %arg3: memref<4x4xf32, #tpu.memory_space<vmem>>, %arg4: memref<4x1xf32, #tpu.memory_space<vmem>>, %arg5: memref<4x4xf32, #tpu.memory_space<vmem>>, %arg6: memref<4x1xf32, #tpu.memory_space<vmem>>, %arg7: memref<1x4x256xf32, #tpu.memory_space<vmem>>) attributes {dimension_semantics = [#tpu.dimension_semantics<parallel>, #tpu.dimension_semantics<parallel>], iteration_bounds = array<i64: 2, 1>, scalar_prefetch = 0 : i64, scratch_operands = 0 : i64, tpu.core_type = #tpu.core_type<tc>, window_params = [{transform_indices = @transform_0, window_bounds = array<i64: 1, 4, 256>}, {pipeline_mode = #tpu.pipeline_mode<synchronous>, transform_indices = @transform_1, window_bounds = array<i64: 4, 4>}, {pipeline_mode = #tpu.pipeline_mode<synchronous>, transform_indices = @transform_2, window_bounds = array<i64: 4, 1>}, {pipeline_mode = #tpu.pipeline_mode<synchronous>, transform_indices = @transform_3, window_bounds = array<i64: 4, 4>}, {pipeline_mode = #tpu.pipeline_mode<synchronous>, transform_indices = @transform_4, window_bounds = array<i64: 4, 1>}, {transform_indices = @transform_5, window_bounds = array<i64: 1, 4, 256>}]} {
    %c0 = arith.constant 0 : index
    %c0_0 = arith.constant 0 : index
    %c0_1 = arith.constant 0 : index
    %0 = vector.load %arg2[%c0, %c0_0, %c0_1] : memref<1x4x256xf32, #tpu.memory_space<vmem>>, vector<1x4x256xf32>
    %1 = vector.shape_cast %0 : vector<1x4x256xf32> to vector<4x256xf32>
    %c0_2 = arith.constant 0 : index
    %c0_3 = arith.constant 0 : index
    %2 = vector.load %arg3[%c0_2, %c0_3] : memref<4x4xf32, #tpu.memory_space<vmem>>, vector<4x4xf32>
    %3 = vector.extract_strided_slice %2 {offsets = [0, 0], sizes = [4, 1], strides = [1, 1]} : vector<4x4xf32> to vector<4x1xf32>
    %4 = vector.extract_strided_slice %1 {offsets = [0, 0], sizes = [1, 256], strides = [1, 1]} : vector<4x256xf32> to vector<1x256xf32>
    %5 = vector.broadcast %3 : vector<4x1xf32> to vector<4x256xf32>
    %6 = vector.broadcast %4 : vector<1x256xf32> to vector<4x256xf32>
    %7 = arith.mulf %5, %6 : vector<4x256xf32>
    %8 = vector.extract_strided_slice %2 {offsets = [0, 1], sizes = [4, 1], strides = [1, 1]} : vector<4x4xf32> to vector<4x1xf32>
    %9 = vector.extract_strided_slice %1 {offsets = [1, 0], sizes = [1, 256], strides = [1, 1]} : vector<4x256xf32> to vector<1x256xf32>
    %10 = vector.broadcast %8 : vector<4x1xf32> to vector<4x256xf32>
    %11 = vector.broadcast %9 : vector<1x256xf32> to vector<4x256xf32>
    %12 = arith.mulf %10, %11 : vector<4x256xf32>
    %13 = arith.addf %7, %12 : vector<4x256xf32>
    %14 = vector.extract_strided_slice %2 {offsets = [0, 2], sizes = [4, 1], strides = [1, 1]} : vector<4x4xf32> to vector<4x1xf32>
    %15 = vector.extract_strided_slice %1 {offsets = [2, 0], sizes = [1, 256], strides = [1, 1]} : vector<4x256xf32> to vector<1x256xf32>
    %16 = vector.broadcast %14 : vector<4x1xf32> to vector<4x256xf32>
    %17 = vector.broadcast %15 : vector<1x256xf32> to vector<4x256xf32>
    %18 = arith.mulf %16, %17 : vector<4x256xf32>
    %19 = arith.addf %13, %18 : vector<4x256xf32>
    %20 = vector.extract_strided_slice %2 {offsets = [0, 3], sizes = [4, 1], strides = [1, 1]} : vector<4x4xf32> to vector<4x1xf32>
    %21 = vector.extract_strided_slice %1 {offsets = [3, 0], sizes = [1, 256], strides = [1, 1]} : vector<4x256xf32> to vector<1x256xf32>
    %22 = vector.broadcast %20 : vector<4x1xf32> to vector<4x256xf32>
    %23 = vector.broadcast %21 : vector<1x256xf32> to vector<4x256xf32>
    %24 = arith.mulf %22, %23 : vector<4x256xf32>
    %25 = arith.addf %19, %24 : vector<4x256xf32>
    %c0_4 = arith.constant 0 : index
    %c0_5 = arith.constant 0 : index
    %26 = vector.load %arg4[%c0_4, %c0_5] : memref<4x1xf32, #tpu.memory_space<vmem>>, vector<4x1xf32>
    %27 = vector.broadcast %26 : vector<4x1xf32> to vector<4x256xf32>
    %28 = arith.addf %25, %27 : vector<4x256xf32>
    %cst = arith.constant 0.000000e+00 : f32
    %cst_6 = arith.constant 6.000000e+00 : f32
    %29 = vector.broadcast %cst : f32 to vector<4x256xf32>
    %30 = arith.maximumf %29, %28 : vector<4x256xf32>
    %31 = vector.broadcast %cst_6 : f32 to vector<4x256xf32>
    %32 = arith.minimumf %31, %30 : vector<4x256xf32>
    %c0_7 = arith.constant 0 : index
    %c0_8 = arith.constant 0 : index
    %33 = vector.load %arg5[%c0_7, %c0_8] : memref<4x4xf32, #tpu.memory_space<vmem>>, vector<4x4xf32>
    %34 = vector.extract_strided_slice %33 {offsets = [0, 0], sizes = [4, 1], strides = [1, 1]} : vector<4x4xf32> to vector<4x1xf32>
    %35 = vector.extract_strided_slice %32 {offsets = [0, 0], sizes = [1, 256], strides = [1, 1]} : vector<4x256xf32> to vector<1x256xf32>
    %36 = vector.broadcast %34 : vector<4x1xf32> to vector<4x256xf32>
    %37 = vector.broadcast %35 : vector<1x256xf32> to vector<4x256xf32>
    %38 = arith.mulf %36, %37 : vector<4x256xf32>
    %39 = vector.extract_strided_slice %33 {offsets = [0, 1], sizes = [4, 1], strides = [1, 1]} : vector<4x4xf32> to vector<4x1xf32>
    %40 = vector.extract_strided_slice %32 {offsets = [1, 0], sizes = [1, 256], strides = [1, 1]} : vector<4x256xf32> to vector<1x256xf32>
    %41 = vector.broadcast %39 : vector<4x1xf32> to vector<4x256xf32>
    %42 = vector.broadcast %40 : vector<1x256xf32> to vector<4x256xf32>
    %43 = arith.mulf %41, %42 : vector<4x256xf32>
    %44 = arith.addf %38, %43 : vector<4x256xf32>
    %45 = vector.extract_strided_slice %33 {offsets = [0, 2], sizes = [4, 1], strides = [1, 1]} : vector<4x4xf32> to vector<4x1xf32>
    %46 = vector.extract_strided_slice %32 {offsets = [2, 0], sizes = [1, 256], strides = [1, 1]} : vector<4x256xf32> to vector<1x256xf32>
    %47 = vector.broadcast %45 : vector<4x1xf32> to vector<4x256xf32>
    %48 = vector.broadcast %46 : vector<1x256xf32> to vector<4x256xf32>
    %49 = arith.mulf %47, %48 : vector<4x256xf32>
    %50 = arith.addf %44, %49 : vector<4x256xf32>
    %51 = vector.extract_strided_slice %33 {offsets = [0, 3], sizes = [4, 1], strides = [1, 1]} : vector<4x4xf32> to vector<4x1xf32>
    %52 = vector.extract_strided_slice %32 {offsets = [3, 0], sizes = [1, 256], strides = [1, 1]} : vector<4x256xf32> to vector<1x256xf32>
    %53 = vector.broadcast %51 : vector<4x1xf32> to vector<4x256xf32>
    %54 = vector.broadcast %52 : vector<1x256xf32> to vector<4x256xf32>
    %55 = arith.mulf %53, %54 : vector<4x256xf32>
    %56 = arith.addf %50, %55 : vector<4x256xf32>
    %c0_9 = arith.constant 0 : index
    %c0_10 = arith.constant 0 : index
    %57 = vector.load %arg6[%c0_9, %c0_10] : memref<4x1xf32, #tpu.memory_space<vmem>>, vector<4x1xf32>
    %58 = vector.broadcast %57 : vector<4x1xf32> to vector<4x256xf32>
    %59 = arith.addf %56, %58 : vector<4x256xf32>
    %c0_11 = arith.constant 0 : index
    %c0_12 = arith.constant 0 : index
    %c0_13 = arith.constant 0 : index
    %60 = vector.load %arg7[%c0_11, %c0_12, %c0_13] : memref<1x4x256xf32, #tpu.memory_space<vmem>>, vector<1x4x256xf32>
    %61 = vector.shape_cast %60 : vector<1x4x256xf32> to vector<4x256xf32>
    %62 = vector.shape_cast %59 : vector<4x256xf32> to vector<1x4x256xf32>
    tpu.vector_store %arg7[%c0_11, %c0_12, %c0_13], %62 {strides = array<i32>} : memref<1x4x256xf32, #tpu.memory_space<vmem>>, vector<1x4x256xf32>,
    return
  }
  func.func @transform_0(%arg0: i32, %arg1: i32) -> (i32, i32, i32) {
    %c0_i32 = arith.constant 0 : i32
    %c0_i32_0 = arith.constant 0 : i32
    return %arg0, %c0_i32, %arg1 : i32, i32, i32
  }
  func.func @transform_1(%arg0: i32, %arg1: i32) -> (i32, i32) {
    %c0_i32 = arith.constant 0 : i32
    %c0_i32_0 = arith.constant 0 : i32
    %c0_i32_1 = arith.constant 0 : i32
    return %c0_i32, %c0_i32_0 : i32, i32
  }
  func.func @transform_2(%arg0: i32, %arg1: i32) -> (i32, i32) {
    %c0_i32 = arith.constant 0 : i32
    %c0_i32_0 = arith.constant 0 : i32
    %c0_i32_1 = arith.constant 0 : i32
    return %c0_i32, %c0_i32_0 : i32, i32
  }
  func.func @transform_3(%arg0: i32, %arg1: i32) -> (i32, i32) {
    %c0_i32 = arith.constant 0 : i32
    %c0_i32_0 = arith.constant 0 : i32
    %c0_i32_1 = arith.constant 0 : i32
    return %c0_i32, %c0_i32_0 : i32, i32
  }
  func.func @transform_4(%arg0: i32, %arg1: i32) -> (i32, i32) {
    %c0_i32 = arith.constant 0 : i32
    %c0_i32_0 = arith.constant 0 : i32
    %c0_i32_1 = arith.constant 0 : i32
    return %c0_i32, %c0_i32_0 : i32, i32
  }
  func.func @transform_5(%arg0: i32, %arg1: i32) -> (i32, i32, i32) {
    %c0_i32 = arith.constant 0 : i32
    %c0_i32_0 = arith.constant 0 : i32
    return %arg0, %c0_i32, %arg1 : i32, i32, i32
  }
}

</mosaic_0001>

<llo_original>
// kernel: tpu_custom_call.1
$region0: #{tpu_custom_call.1}
  #allocation0 [shape = 'u32[]', space=smem, size = 0x4, offset = 0x4, fixed_abs, tag = 'smem constant byte address 0x4 - core index']
  #allocation1 [shape = 'u32[144,128]{1,0:T(1,128)}', space=vmem, size = 0x12000, scoped, tag = 'internal scratch']
  %s0 = inlined_call_operand.hbm [shape: f32[2,4,256], index: 0, kind: input, shape index: {}]
  %s1 = inlined_call_operand.vmem [shape: f32[4,4], index: 1, kind: input, shape index: {}]
  %s2 = inlined_call_operand.vmem [shape: f32[4,1], index: 2, kind: input, shape index: {}]
  %s3 = inlined_call_operand.vmem [shape: f32[4,4], index: 3, kind: input, shape index: {}]
  %s4 = inlined_call_operand.vmem [shape: f32[4,1], index: 4, kind: input, shape index: {}]
  %s5 = inlined_call_operand.hbm [shape: f32[2,4,256], index: 5, kind: output, shape index: {}]
  %s6 = sld [smem:[#allocation0]]
  $region57: #{tpu_custom_call.1} parent=0
    _
  %s8 = ssub.s32 1, %s6
  %s9 = scalar_select 0, %s8, %s6
  $region1: #{tpu_custom_call.1} parent=0
    #allocation2 [shape = 'u8[8192]{0}', space=vmem, size = 0x2000, scoped, tag = 'input window, operand 0']
    #allocation3 [shape = 's32[2]{0}', space=sflag, size = 0x8, scoped, tag = 'scoped memory for tpu_custom_call.1']
    #allocation4 [shape = 's32[2]{0}', space=sflag, size = 0x8, scoped, tag = 'scoped memory for tpu_custom_call.1']
    #allocation5 [shape = 'u8[8192]{0}', space=vmem, size = 0x2000, scoped, tag = 'output window, operand 0']
    %10 = vsyncpa [#allocation3], 0
    %s11 = scalar_lea.sflag [#allocation3], 1
    %12 = vsyncpa %s11, 0
    %13 = vsyncpa [#allocation4], 0
    %s14 = scalar_lea.sflag [#allocation4], 1
    %15 = vsyncpa %s14, 0
    loop: start=0, step=1, limit=4
    $region2: #{tpu_custom_call.1} parent=1 // loop_pre_header
      _
    $region3: #{tpu_custom_call.1} parent=1 // loop_header
      %s17 = sphi 0, %s21
      %p18 = scmp.ge.s32.totalorder %s17, 4
      %s24 = sphi 0, %s36
      %s25 = sphi 0, %s32
      %s26 = sphi 0, %s24
      %s27 = sphi 0, %s25
      %s28 = sphi 0, %s26
      %s29 = sphi 0, %s27
      %s41 = sphi 0, %s43
      %s44 = sphi 0, %s41
      %s45 = sphi 0, %s44
      %s61 = sphi 0, %s45
      %s65 = sphi 0, %s65
      %s67 = sphi 0, %s65
      %s68 = sphi 0, %s67
      %s82 = sphi 0, %s68
      %s86 = sphi 0, %s86
      %s88 = sphi 0, %s86
      %s89 = sphi 0, %s88
      %s103 = sphi 0, %s89
      %s107 = sphi 0, %s107
      %s109 = sphi 0, %s107
      %s110 = sphi 0, %s109
      %s124 = sphi 0, %s110
      %s128 = sphi 0, %s128
      %s130 = sphi 0, %s128
      %s131 = sphi 0, %s130
      %s145 = sphi 0, %s131
      %s153 = sphi 0, %s155
      %s156 = sphi 0, %s153
      %s157 = sphi 0, %s156
      %s173 = sphi 0, %s157
    $region4: #{tpu_custom_call.1} parent=1 // loop_header_branch
      %20 = sbr.rel (%p18) target = $region8
    $region5: #{tpu_custom_call.1} parent=1 // loop_body
      %s22 = ssub.s32 %s17, 1
      %s23 = ssub.s32 %s17, 2
      %s30 = sadd.s32 1, %s25
      %p31 = scmp.ge.s32.totalorder %s30, 1
      %s32 = scalar_select %p31, 0, %s30
      %s33 = sadd.s32 1, %s24
      %s34 = scalar_select %p31, %s33, %s24
      %p35 = scmp.ge.s32.totalorder %s34, 2
      %s36 = scalar_select %p35, 0, %s34
      %s37 = ssub.s32 %s24, %s36
      %s38 = ssub.s32 %s25, %s32
      %s39 = sor.u32 %s37, %s38
      %p40 = scmp.eq.s32.totalorder %s39, 0
      %s42 = sadd.s32 %s41, 1
      %s43 = scalar_select %p40, %s41, %s42
      %p46 = pneg %p40
      %p47 = scmp.eq.s32.totalorder %s17, 1
      %p48 = por %p46, %p47
      %p49 = scmp.ne.s32.totalorder %s41, %s44
      %p50 = scmp.eq.s32.totalorder %s17, 0
      %p51 = por %p49, %p50
      %p52 = scmp.ne.s32.totalorder %s41, %s44
      %p53 = scmp.eq.s32.totalorder %s22, 1
      %p54 = por %p52, %p53
      %p55 = scmp.ne.s32.totalorder %s44, %s45
      %p56 = scmp.eq.s32.totalorder %s22, 0
      %p57 = por %p55, %p56
      %p58 = scmp.ne.s32.totalorder %s44, %s45
      %p59 = scmp.eq.s32.totalorder %s23, 1
      %p60 = por %p58, %p59
      %p62 = scmp.ne.s32.totalorder %s45, %s61
      %p63 = scmp.eq.s32.totalorder %s23, 0
      %p64 = por %p62, %p63
      %s66 = sadd.s32 %s65, 1
      %p69 = scmp.eq.s32.totalorder %s17, 1
      %p70 = scmp.ne.s32.totalorder %s65, %s67
      %p71 = scmp.eq.s32.totalorder %s17, 0
      %p72 = por %p70, %p71
      %p73 = scmp.ne.s32.totalorder %s65, %s67
      %p74 = scmp.eq.s32.totalorder %s22, 1
      %p75 = por %p73, %p74
      %p76 = scmp.ne.s32.totalorder %s67, %s68
      %p77 = scmp.eq.s32.totalorder %s22, 0
      %p78 = por %p76, %p77
      %p79 = scmp.ne.s32.totalorder %s67, %s68
      %p80 = scmp.eq.s32.totalorder %s23, 1
      %p81 = por %p79, %p80
      %p83 = scmp.ne.s32.totalorder %s68, %s82
      %p84 = scmp.eq.s32.totalorder %s23, 0
      %p85 = por %p83, %p84
      %s87 = sadd.s32 %s86, 1
      %p90 = scmp.eq.s32.totalorder %s17, 1
      %p91 = scmp.ne.s32.totalorder %s86, %s88
      %p92 = scmp.eq.s32.totalorder %s17, 0
      %p93 = por %p91, %p92
      %p94 = scmp.ne.s32.totalorder %s86, %s88
      %p95 = scmp.eq.s32.totalorder %s22, 1
      %p96 = por %p94, %p95
      %p97 = scmp.ne.s32.totalorder %s88, %s89
      %p98 = scmp.eq.s32.totalorder %s22, 0
      %p99 = por %p97, %p98
      %p100 = scmp.ne.s32.totalorder %s88, %s89
      %p101 = scmp.eq.s32.totalorder %s23, 1
      %p102 = por %p100, %p101
      %p104 = scmp.ne.s32.totalorder %s89, %s103
      %p105 = scmp.eq.s32.totalorder %s23, 0
      %p106 = por %p104, %p105
      %s108 = sadd.s32 %s107, 1
      %p111 = scmp.eq.s32.totalorder %s17, 1
      %p112 = scmp.ne.s32.totalorder %s107, %s109
      %p113 = scmp.eq.s32.totalorder %s17, 0
      %p114 = por %p112, %p113
      %p115 = scmp.ne.s32.totalorder %s107, %s109
      %p116 = scmp.eq.s32.totalorder %s22, 1
      %p117 = por %p115, %p116
      %p118 = scmp.ne.s32.totalorder %s109, %s110
      %p119 = scmp.eq.s32.totalorder %s22, 0
      %p120 = por %p118, %p119
      %p121 = scmp.ne.s32.totalorder %s109, %s110
      %p122 = scmp.eq.s32.totalorder %s23, 1
      %p123 = por %p121, %p122
      %p125 = scmp.ne.s32.totalorder %s110, %s124
      %p126 = scmp.eq.s32.totalorder %s23, 0
      %p127 = por %p125, %p126
      %s129 = sadd.s32 %s128, 1
      %p132 = scmp.eq.s32.totalorder %s17, 1
      %p133 = scmp.ne.s32.totalorder %s128, %s130
      %p134 = scmp.eq.s32.totalorder %s17, 0
      %p135 = por %p133, %p134
      %p136 = scmp.ne.s32.totalorder %s128, %s130
      %p137 = scmp.eq.s32.totalorder %s22, 1
      %p138 = por %p136, %p137
      %p139 = scmp.ne.s32.totalorder %s130, %s131
      %p140 = scmp.eq.s32.totalorder %s22, 0
      %p141 = por %p139, %p140
      %p142 = scmp.ne.s32.totalorder %s130, %s131
      %p143 = scmp.eq.s32.totalorder %s23, 1
      %p144 = por %p142, %p143
      %p146 = scmp.ne.s32.totalorder %s131, %s145
      %p147 = scmp.eq.s32.totalorder %s23, 0
      %p148 = por %p146, %p147
      %s149 = ssub.s32 %s24, %s36
      %s150 = ssub.s32 %s25, %s32
      %s151 = sor.u32 %s149, %s150
      %p152 = scmp.eq.s32.totalorder %s151, 0
      %s154 = sadd.s32 %s153, 1
      %s155 = scalar_select %p152, %s153, %s154
      %p158 = pneg %p152
      %p159 = scmp.eq.s32.totalorder %s17, 1
      %p160 = por %p158, %p159
      %p161 = scmp.ne.s32.totalorder %s153, %s156
      %p162 = scmp.eq.s32.totalorder %s17, 0
      %p163 = por %p161, %p162
      %p164 = scmp.ne.s32.totalorder %s153, %s156
      %p165 = scmp.eq.s32.totalorder %s22, 1
      %p166 = por %p164, %p165
      %p167 = scmp.ne.s32.totalorder %s156, %s157
      %p168 = scmp.eq.s32.totalorder %s22, 0
      %p169 = por %p167, %p168
      %p170 = scmp.ne.s32.totalorder %s156, %s157
      %p171 = scmp.eq.s32.totalorder %s23, 1
      %p172 = por %p170, %p171
      %p174 = scmp.ne.s32.totalorder %s157, %s173
      %p175 = scmp.eq.s32.totalorder %s23, 0
      %p176 = por %p174, %p175
      %p177 = scmp.le.s32.totalorder 1, %s17
      %p178 = scmp.lt.s32.totalorder %s17, 3
      %p179 = pnand %p177, %p178
      %p180 = pneg %p179
      // Predicated region
      $region9: #{tpu_custom_call.1} parent=5 // pred_check
        _
      $region10: #{tpu_custom_call.1} parent=5 // pred_check_branch
        %182 = sbr.rel (%p179) target = $region12
      $region11: #{tpu_custom_call.1} parent=5 // pred_region
        %s183 = ssub.s32 %s17, 1
        // Predicated region
        $region13: #{tpu_custom_call.1} parent=11 // pred_check
          %p184 = pneg %p78
        $region14: #{tpu_custom_call.1} parent=11 // pred_check_branch
          %186 = sbr.rel (%p184) target = $region16
        $region15: #{tpu_custom_call.1} parent=11 // pred_region
          _
        $region16: #{tpu_custom_call.1} parent=11 // pred_fallthru
          _
        // Predicated region
        $region17: #{tpu_custom_call.1} parent=11 // pred_check
          %p187 = pneg %p99
        $region18: #{tpu_custom_call.1} parent=11 // pred_check_branch
          %189 = sbr.rel (%p187) target = $region20
        $region19: #{tpu_custom_call.1} parent=11 // pred_region
          _
        $region20: #{tpu_custom_call.1} parent=11 // pred_fallthru
          _
        // Predicated region
        $region21: #{tpu_custom_call.1} parent=11 // pred_check
          %p190 = pneg %p120
        $region22: #{tpu_custom_call.1} parent=11 // pred_check_branch
          %192 = sbr.rel (%p190) target = $region24
        $region23: #{tpu_custom_call.1} parent=11 // pred_region
          _
        $region24: #{tpu_custom_call.1} parent=11 // pred_fallthru
          _
        // Predicated region
        $region25: #{tpu_custom_call.1} parent=11 // pred_check
          %p193 = pneg %p141
        $region26: #{tpu_custom_call.1} parent=11 // pred_check_branch
          %195 = sbr.rel (%p193) target = $region28
        $region27: #{tpu_custom_call.1} parent=11 // pred_region
          _
        $region28: #{tpu_custom_call.1} parent=11 // pred_fallthru
          _
      $region12: #{tpu_custom_call.1} parent=5 // pred_fallthru
        _
      %p196 = scmp.lt.s32.totalorder %s17, 2
      // Predicated region
      $region29: #{tpu_custom_call.1} parent=5 // pred_check
        %p197 = pneg %p196
      $region30: #{tpu_custom_call.1} parent=5 // pred_check_branch
        %199 = sbr.rel (%p197) target = $region32
      $region31: #{tpu_custom_call.1} parent=5 // pred_region
        // Predicated region
        $region33: #{tpu_custom_call.1} parent=31 // pred_check
          %p200 = pneg %p51
        $region34: #{tpu_custom_call.1} parent=31 // pred_check_branch
          %202 = sbr.rel (%p200) target = $region36
        $region35: #{tpu_custom_call.1} parent=31 // pred_region
          %s203 = sand.u32 %s41, 1
          %s204 = scalar_lea.sflag [#allocation3], %s203
          %s205 = sand.u32 %s41, 1
          %s206 = smul.addr %s205, 8
          %s207 = scalar_lea.vmem [#allocation2], %s206
          %s208 = smul.u32 2, %s25
          %s210 = ssub.s32 128, 128
          %211 = vsyncadd %s204, %s210
          %s212 = smul.addr %s24, 2
          %s213 = sadd.s32 %s208, %s212
          %s214 = smul.addr %s213, 64
          %s215 = scalar_lea.hbm %s0, %s214
          %s217 = sshll.u32 %s207, 4
          %s218 = int_to_ptr.vmem [resolvable:$true] %s217
          %220 = dma.hbm_to_vmem [thread:$0]  %s215, 128, %s218, %s204
        $region36: #{tpu_custom_call.1} parent=31 // pred_fallthru
          _
      $region32: #{tpu_custom_call.1} parent=5 // pred_fallthru
        _
      %p221 = scmp.le.s32.totalorder 1, %s17
      %p222 = scmp.lt.s32.totalorder %s17, 3
      %p223 = pnand %p221, %p222
      %p224 = pneg %p223
      // Predicated region
      $region37: #{tpu_custom_call.1} parent=5 // pred_check
        _
      $region38: #{tpu_custom_call.1} parent=5 // pred_check_branch
        %226 = sbr.rel (%p223) target = $region40
      $region39: #{tpu_custom_call.1} parent=5 // pred_region
        %s227 = ssub.s32 %s17, 1
        %s228 = sand.u32 %s44, 1
        %s229 = scalar_lea.sflag [#allocation3], %s228
        %s230 = sand.u32 %s44, 1
        %s231 = smul.addr %s230, 8
        %s232 = scalar_lea.vmem [#allocation2], %s231
        // Predicated region
        $region41: #{tpu_custom_call.1} parent=39 // pred_check
          %p233 = pneg %p57
        $region42: #{tpu_custom_call.1} parent=39 // pred_check_branch
          %235 = sbr.rel (%p233) target = $region44
        $region43: #{tpu_custom_call.1} parent=39 // pred_region
          %236 = dma.done %s229, 128
        $region44: #{tpu_custom_call.1} parent=39 // pred_fallthru
          _
        %s237 = sand.u32 %s44, 1
        %s238 = scalar_lea.sflag [#allocation3], %s237
        %s239 = sand.u32 %s44, 1
        %s240 = smul.addr %s239, 8
        %s241 = scalar_lea.vmem [#allocation2], %s240
        %p242 = pneg %p57
        %p243 = pneg %p54
        %p244 = pneg %p78
        %p245 = pneg %p75
        %p246 = pneg %p99
        %p247 = pneg %p96
        %p248 = pneg %p120
        %p249 = pneg %p117
        %p250 = pneg %p141
        %p251 = pneg %p138
        %p252 = pneg %p169
        %p253 = pneg %p166
        %s254 = sand.u32 %s156, 1
        %s255 = scalar_lea.sflag [#allocation4], %s254
        %s256 = sand.u32 %s156, 1
        %s257 = smul.addr %s256, 8
        %s258 = scalar_lea.vmem [#allocation5], %s257
        %s259 = smul.u32 2, %s27
        %s260 = smul.u32 2, %s27
        %v261 = vld [vmem:[%s232] sm:$0xff]
        %v262 = vld [vmem:[%s1] sm:$0xf]
        %264 = vset.pattern.permute.xlu0 0
        %265 = vperm.xlu0 %264, %v262
        %v266 = vpop.permute.xlu0 %265
        %v269 = vlaneseq
        %v270 = vshrl.u32 %v269, 7
        %v271 = vsub.s32 0, %v270
        %v272 = vrot.slane %v261, %v271
        %v273 = vlaneseq
        %v274 = vshrl.u32 %v273, 7
        %v275 = vsub.s32 4, %v274
        %v276 = vrot.slane %v261, %v275
        %v279 = vlaneseq
        %v280 = vshrl.u32 %v279, 7
        %v281 = vsub.s32 0, %v280
        %v282 = vrot.slane %v272, %v281
        %v283 = vlaneseq
        %v284 = vshrl.u32 %v283, 7
        %v285 = vsub.s32 0, %v284
        %v286 = vrot.slane %v276, %v285
        %v287 = vmul.f32 %v266, %v282
        %v288 = vmul.f32 %v266, %v286
        %289 = vset.pattern.permute.xlu0 1
        %290 = vperm.xlu0 %289, %v262
        %v291 = vpop.permute.xlu0 %290
        %v293 = vlaneseq
        %v294 = vshrl.u32 %v293, 7
        %v295 = vsub.s32 1, %v294
        %v296 = vrot.slane %v261, %v295
        %v297 = vlaneseq
        %v298 = vshrl.u32 %v297, 7
        %v299 = vsub.s32 5, %v298
        %v300 = vrot.slane %v261, %v299
        %v303 = vlaneseq
        %v304 = vshrl.u32 %v303, 7
        %v305 = vsub.s32 1, %v304
        %v306 = vrot.slane %v296, %v305
        %v307 = vlaneseq
        %v308 = vshrl.u32 %v307, 7
        %v309 = vsub.s32 1, %v308
        %v310 = vrot.slane %v300, %v309
        %v311 = vmul.f32 %v291, %v306
        %v312 = vmul.f32 %v291, %v310
        %v313 = vadd.f32 %v287, %v311
        %v314 = vadd.f32 %v288, %v312
        %315 = vset.pattern.permute.xlu0 2
        %316 = vperm.xlu0 %315, %v262
        %v317 = vpop.permute.xlu0 %316
        %v319 = vlaneseq
        %v320 = vshrl.u32 %v319, 7
        %v321 = vsub.s32 2, %v320
        %v322 = vrot.slane %v261, %v321
        %v323 = vlaneseq
        %v324 = vshrl.u32 %v323, 7
        %v325 = vsub.s32 6, %v324
        %v326 = vrot.slane %v261, %v325
        %v329 = vlaneseq
        %v330 = vshrl.u32 %v329, 7
        %v331 = vsub.s32 2, %v330
        %v332 = vrot.slane %v322, %v331
        %v333 = vlaneseq
        %v334 = vshrl.u32 %v333, 7
        %v335 = vsub.s32 2, %v334
        %v336 = vrot.slane %v326, %v335
        %v337 = vmul.f32 %v317, %v332
        %v338 = vmul.f32 %v317, %v336
        %v339 = vadd.f32 %v313, %v337
        %v340 = vadd.f32 %v314, %v338
        %341 = vset.pattern.permute.xlu0 3
        %342 = vperm.xlu0 %341, %v262
        %v343 = vpop.permute.xlu0 %342
        %v345 = vlaneseq
        %v346 = vshrl.u32 %v345, 7
        %v347 = vsub.s32 3, %v346
        %v348 = vrot.slane %v261, %v347
        %v349 = vlaneseq
        %v350 = vshrl.u32 %v349, 7
        %v351 = vsub.s32 7, %v350
        %v352 = vrot.slane %v261, %v351
        %v355 = vlaneseq
        %v356 = vshrl.u32 %v355, 7
        %v357 = vsub.s32 3, %v356
        %v358 = vrot.slane %v348, %v357
        %v359 = vlaneseq
        %v360 = vshrl.u32 %v359, 7
        %v361 = vsub.s32 3, %v360
        %v362 = vrot.slane %v352, %v361
        %v363 = vmul.f32 %v343, %v358
        %v364 = vmul.f32 %v343, %v362
        %v365 = vadd.f32 %v339, %v363
        %v366 = vadd.f32 %v340, %v364
        %v367 = vld [vmem:[%s2] sm:$0xf]
        %369 = vset.pattern.permute.xlu0 0
        %370 = vperm.xlu0 %369, %v367
        %v371 = vpop.permute.xlu0 %370
        %v373 = vadd.f32 %v365, %v371
        %v374 = vadd.f32 %v366, %v371
        %v375 = vmax.f32 %v373, 0.0
        %v376 = vmax.f32 %v374, 0.0
        %v377 = vmin.f32 %v375, 6.0
        %v378 = vmin.f32 %v376, 6.0
        %v379 = vld [vmem:[%s3] sm:$0xf]
        %381 = vset.pattern.permute.xlu0 0
        %382 = vperm.xlu0 %381, %v379
        %v383 = vpop.permute.xlu0 %382
        %v385 = vlaneseq
        %v386 = vshrl.u32 %v385, 7
        %v387 = vsub.s32 0, %v386
        %v388 = vrot.slane %v377, %v387
        %v389 = vlaneseq
        %v390 = vshrl.u32 %v389, 7
        %v391 = vsub.s32 0, %v390
        %v392 = vrot.slane %v378, %v391
        %v393 = vmul.f32 %v383, %v388
        %v394 = vmul.f32 %v383, %v392
        %395 = vset.pattern.permute.xlu0 1
        %396 = vperm.xlu0 %395, %v379
        %v397 = vpop.permute.xlu0 %396
        %v399 = vlaneseq
        %v400 = vshrl.u32 %v399, 7
        %v401 = vsub.s32 1, %v400
        %v402 = vrot.slane %v377, %v401
        %v403 = vlaneseq
        %v404 = vshrl.u32 %v403, 7
        %v405 = vsub.s32 1, %v404
        %v406 = vrot.slane %v378, %v405
        %v407 = vmul.f32 %v397, %v402
        %v408 = vmul.f32 %v397, %v406
        %v409 = vadd.f32 %v393, %v407
        %v410 = vadd.f32 %v394, %v408
        %411 = vset.pattern.permute.xlu0 2
        %412 = vperm.xlu0 %411, %v379
        %v413 = vpop.permute.xlu0 %412
        %v415 = vlaneseq
        %v416 = vshrl.u32 %v415, 7
        %v417 = vsub.s32 2, %v416
        %v418 = vrot.slane %v377, %v417
        %v419 = vlaneseq
        %v420 = vshrl.u32 %v419, 7
        %v421 = vsub.s32 2, %v420
        %v422 = vrot.slane %v378, %v421
        %v423 = vmul.f32 %v413, %v418
        %v424 = vmul.f32 %v413, %v422
        %v425 = vadd.f32 %v409, %v423
        %v426 = vadd.f32 %v410, %v424
        %427 = vset.pattern.permute.xlu0 3
        %428 = vperm.xlu0 %427, %v379
        %v429 = vpop.permute.xlu0 %428
        %v431 = vlaneseq
        %v432 = vshrl.u32 %v431, 7
        %v433 = vsub.s32 3, %v432
        %v434 = vrot.slane %v377, %v433
        %v435 = vlaneseq
        %v436 = vshrl.u32 %v435, 7
        %v437 = vsub.s32 3, %v436
        %v438 = vrot.slane %v378, %v437
        %v439 = vmul.f32 %v429, %v434
        %v440 = vmul.f32 %v429, %v438
        %v441 = vadd.f32 %v425, %v439
        %v442 = vadd.f32 %v426, %v440
        %v443 = vld [vmem:[%s4] sm:$0xf]
        %445 = vset.pattern.permute.xlu0 0
        %446 = vperm.xlu0 %445, %v443
        %v447 = vpop.permute.xlu0 %446
        %v449 = vadd.f32 %v441, %v447
        %v450 = vadd.f32 %v442, %v447
        %v453 = vcombine.low %v449, %v450
        %455 = vst [vmem:[%s258] sm:$0xff] %v453
        %s456 = sand.u32 %s156, 1
        %s457 = scalar_lea.sflag [#allocation4], %s456
        %s458 = sand.u32 %s156, 1
        %s459 = smul.addr %s458, 8
        %s460 = scalar_lea.vmem [#allocation5], %s459
        // Predicated region
        $region45: #{tpu_custom_call.1} parent=39 // pred_check
          %p461 = pneg %p166
        $region46: #{tpu_custom_call.1} parent=39 // pred_check_branch
          %463 = sbr.rel (%p461) target = $region48
        $region47: #{tpu_custom_call.1} parent=39 // pred_region
          %s464 = smul.u32 2, %s27
          %s466 = ssub.s32 128, 128
          %467 = vsyncadd %s457, %s466
          %s468 = smul.addr %s26, 2
          %s469 = sadd.s32 %s464, %s468
          %s470 = smul.addr %s469, 64
          %s471 = scalar_lea.hbm %s5, %s470
          %s473 = sshll.u32 %s460, 4
          %s474 = int_to_ptr.vmem [resolvable:$true] %s473
          %476 = dma.vmem_to_hbm [thread:$0]  %s474, 128, %s471, %s457
        $region48: #{tpu_custom_call.1} parent=39 // pred_fallthru
          _
      $region40: #{tpu_custom_call.1} parent=5 // pred_fallthru
        _
      %p477 = scmp.le.s32.totalorder 2, %s17
      // Predicated region
      $region49: #{tpu_custom_call.1} parent=5 // pred_check
        %p478 = pneg %p477
      $region50: #{tpu_custom_call.1} parent=5 // pred_check_branch
        %480 = sbr.rel (%p478) target = $region52
      $region51: #{tpu_custom_call.1} parent=5 // pred_region
        %s481 = ssub.s32 %s17, 2
        // Predicated region
        $region53: #{tpu_custom_call.1} parent=51 // pred_check
          %p482 = pneg %p172
        $region54: #{tpu_custom_call.1} parent=51 // pred_check_branch
          %484 = sbr.rel (%p482) target = $region56
        $region55: #{tpu_custom_call.1} parent=51 // pred_region
          %s485 = sand.u32 %s157, 1
          %s486 = scalar_lea.sflag [#allocation4], %s485
          %s487 = sand.u32 %s157, 1
          %s488 = smul.addr %s487, 8
          %s489 = scalar_lea.vmem [#allocation5], %s488
          %490 = dma.done %s486, 128
        $region56: #{tpu_custom_call.1} parent=51 // pred_fallthru
          _
      $region52: #{tpu_custom_call.1} parent=5 // pred_fallthru
        _
    $region6: #{tpu_custom_call.1} parent=1 // loop_footer
      %s21 = sadd.s32 1, %s17
    $region7: #{tpu_custom_call.1} parent=1 // loop_footer_branch
      %16 = sbr.rel target = $region3
    $region8: #{tpu_custom_call.1} parent=1 // loop_exit
      _
    %491 = vsyncpa [#allocation3], 1
    %s492 = scalar_lea.sflag [#allocation3], 1
    %493 = vsyncpa %s492, 1
    %494 = vsyncpa [#allocation4], 1
    %s495 = scalar_lea.sflag [#allocation4], 1
    %496 = vsyncpa %s495, 1

</llo_original>
